<compile_context>
chip_gen: v7x
topology: tpu7x:2x2x1
jax: 0.10.0
libtpu: 0.0.40
codegen_flags: <defaults>
</compile_context>

<pallas_src>
import numpy as np
import jax
import jax.numpy as jnp
from jax.experimental import pallas as pl
from jax.experimental.pallas import tpu as pltpu


# ----------------------------- glue (plain numpy, done once) -----------------------------
def _adaptive_avg_pool1d_matrix(L: int, S: int) -> np.ndarray:
    """(L, S) matrix M such that x @ M == AdaptiveAvgPool1d(S)(x) for x of shape (..., L)."""
    P = np.zeros((L, S), dtype=np.float32)
    for i in range(S):
        start = (i * L) // S
        end = -((-(i + 1) * L) // S)  # ceil((i+1)*L/S)
        P[start:end, i] = 1.0 / float(end - start)
    return P


def build_pooling_matrix(L: int, outsizes, lane: int = 128):
    """Concatenated pooling matrices, zero-padded to a lane-dense column count."""
    P = np.concatenate([_adaptive_avg_pool1d_matrix(L, int(s)) for s in outsizes], axis=1)
    S = P.shape[1]
    S_pad = ((S + lane - 1) // lane) * lane
    if S_pad != S:
        P = np.pad(P, ((0, 0), (0, S_pad - S)))
    return P, S


def _num_tensorcores() -> int:
    """Best-effort TensorCore count per chip (v7x: 2; v5e/v6e: 1).  Conservative default 1."""
    try:
        kind = jax.devices()[0].device_kind.lower()
    except Exception:
        return 1
    return 2 if "v7" in kind else 1


# ----------------------------- Pallas kernel (hot path) -----------------------------
def _mmap_kernel(x_ref, p_ref, w_ref, b_ref, o_ref):
    # x_ref: (Nb, C_in, L)       natural input layout, one batch tile
    # p_ref: (L, S_pad)          concatenated pooling matrices, lane-dense zero padding
    # w_ref: (C_out, C_in)       1x1 Conv1d weight
    # b_ref: (C_out, 1)          bias (VPU broadcast add)
    # o_ref: (Nb, C_out, S_pad)  output, already in final layout
    p = p_ref[...]
    w = w_ref[...]
    b = b_ref[...]
    nb = o_ref.shape[0]  # static, small (1 or 2)
    for n in range(nb):  # static unroll; pure 2-D matmuls, no cross-tile reshapes
        # conv first: K = C_in contraction, result (C_out, L)
        y = jnp.dot(w, x_ref[n], preferred_element_type=jnp.float32)
        # wide-S matmul contracts over K = L; lane-dense (S_pad = 128k) result
        out = jnp.dot(y, p, preferred_element_type=jnp.float32)       # (C_out, S_pad)
        o_ref[n] = (out + b).astype(o_ref.dtype)                      # bias on the VPU


def multi_model_adapt_pooling(x, w, b, pool_mat_padded, S):
    N, C_in, L = x.shape
    C_out = w.shape[0]
    S_pad = pool_mat_padded.shape[1]

    # Split the batch across TensorCores only when there are 2 of them (v7x);
    # on 1-TC chips a single big grid step avoids pointless per-step overhead.
    cores = _num_tensorcores()
    G = 2 if (cores >= 2 and N >= 2 and N % 2 == 0) else 1
    Nb = N // G

    b2 = b.reshape(C_out, 1)

    out = pl.pallas_call(
        _mmap_kernel,
        out_shape=jax.ShapeDtypeStruct((N, C_out, S_pad), x.dtype),
        grid_spec=pltpu.PrefetchScalarGridSpec(
            num_scalar_prefetch=0,
            grid=(G,),
            in_specs=[
                pl.BlockSpec((Nb, C_in, L), lambda g: (g, 0, 0)),   # natural x layout
                pl.BlockSpec((L, S_pad), lambda g: (0, 0)),         # grid-invariant P
                pl.BlockSpec((C_out, C_in), lambda g: (0, 0)),      # grid-invariant W
                pl.BlockSpec((C_out, 1), lambda g: (0, 0)),         # grid-invariant b
            ],
            out_specs=pl.BlockSpec((Nb, C_out, S_pad), lambda g: (g, 0, 0)),
        ),
        compiler_params=pltpu.CompilerParams(
            dimension_semantics=("parallel",),
            vmem_limit_bytes=32 * 1024 * 1024,
        ),
    )(x, pool_mat_padded, w, b2)

    # Only remaining wrapper op: drop the lane padding on the last dim.
    return out[..., :S]


# ----------------------------- reference (numpy) -----------------------------
def _reference(x_np, w_np, b_np, outsizes):
    N, C, L = x_np.shape
    outs = []
    for S in outsizes:
        S = int(S)
        pooled = np.zeros((N, C, S), np.float32)
        for i in range(S):
            s = (i * L) // S
            e = -((-(i + 1) * L) // S)
            pooled[:, :, i] = x_np[:, :, s:e].mean(-1)
        conv = np.einsum("oc,ncs->nos", w_np, pooled) + b_np[None, :, None]
        outs.append(conv)
    return np.concatenate(outs, -1)


if __name__ == "__main__":
    # small, module-consistent shapes
    N, C_in, C_out, L = 2, 4, 4, 16
    outsizes = np.array([9, 25, 64])  # default outsizelist of MultiModelAdaptPooling

    key = jax.random.PRNGKey(0)
    kx, kw, kb = jax.random.split(key, 3)
    x = jax.random.normal(kx, (N, C_in, L), dtype=jnp.float32)
    # deterministic init for the wrapped "model" = Conv1d(C_in, C_out, kernel_size=1)
    bound = 1.0 / np.sqrt(C_in)
    w = jax.random.uniform(kw, (C_out, C_in), minval=-bound, maxval=bound, dtype=jnp.float32)
    b = jax.random.uniform(kb, (C_out,), minval=-bound, maxval=bound, dtype=jnp.float32)

    pool_np, S_total = build_pooling_matrix(L, outsizes)  # (L, 128) lane-dense, S_total = 98
    pool_mat = jnp.asarray(pool_np)

    out = multi_model_adapt_pooling(x, w, b, pool_mat, S_total)
    out = jax.block_until_ready(out)

    ref = _reference(np.asarray(x), np.asarray(w), np.asarray(b), outsizes)
    np.testing.assert_allclose(np.asarray(out), ref, rtol=1e-5, atol=1e-5)
    print("KERNEL_OK")
</pallas_src>

<mosaic_0001>
module attributes {stable_mosaic.version = 11 : i64} {
  func.func @_mmap_kernel(%arg0: i32, %arg1: memref<2x4x16xf32, #tpu.memory_space<vmem>>, %arg2: memref<16x128xf32, #tpu.memory_space<vmem>>, %arg3: memref<4x4xf32, #tpu.memory_space<vmem>>, %arg4: memref<4x1xf32, #tpu.memory_space<vmem>>, %arg5: memref<2x4x128xf32, #tpu.memory_space<vmem>>) attributes {dimension_semantics = [#tpu.dimension_semantics<parallel>], iteration_bounds = array<i64: 1>, scalar_prefetch = 0 : i64, scratch_operands = 0 : i64, tpu.core_type = #tpu.core_type<tc>, window_params = [{transform_indices = @transform_0, window_bounds = array<i64: 2, 4, 16>}, {pipeline_mode = #tpu.pipeline_mode<synchronous>, transform_indices = @transform_1, window_bounds = array<i64: 16, 128>}, {pipeline_mode = #tpu.pipeline_mode<synchronous>, transform_indices = @transform_2, window_bounds = array<i64: 4, 4>}, {pipeline_mode = #tpu.pipeline_mode<synchronous>, transform_indices = @transform_3, window_bounds = array<i64: 4, 1>}, {transform_indices = @transform_4, window_bounds = array<i64: 2, 4, 128>}]} {
    %c0 = arith.constant 0 : index
    %c0_0 = arith.constant 0 : index
    %0 = vector.load %arg2[%c0, %c0_0] : memref<16x128xf32, #tpu.memory_space<vmem>>, vector<16x128xf32>
    %c0_1 = arith.constant 0 : index
    %c0_2 = arith.constant 0 : index
    %1 = vector.load %arg3[%c0_1, %c0_2] : memref<4x4xf32, #tpu.memory_space<vmem>>, vector<4x4xf32>
    %c0_3 = arith.constant 0 : index
    %c0_4 = arith.constant 0 : index
    %2 = vector.load %arg4[%c0_3, %c0_4] : memref<4x1xf32, #tpu.memory_space<vmem>>, vector<4x1xf32>
    %c0_5 = arith.constant 0 : index
    %c0_6 = arith.constant 0 : index
    %c0_7 = arith.constant 0 : index
    %3 = vector.load %arg1[%c0_5, %c0_6, %c0_7] : memref<2x4x16xf32, #tpu.memory_space<vmem>>, vector<1x4x16xf32>
    %4 = vector.shape_cast %3 : vector<1x4x16xf32> to vector<4x16xf32>
    %cst = arith.constant dense<0.000000e+00> : vector<4x16xf32>
    %5 = tpu.matmul %1, %4, %cst {dimension_numbers = #tpu.dot_dimension_numbers<[1], [0], [0], [1], [0, 0, 1, 1], [], []>} : vector<4x4xf32>, vector<4x16xf32>, vector<4x16xf32> -> vector<4x16xf32>
    %cst_8 = arith.constant dense<0.000000e+00> : vector<4x128xf32>
    %6 = tpu.matmul %5, %0, %cst_8 {dimension_numbers = #tpu.dot_dimension_numbers<[1], [0], [0], [1], [0, 0, 1, 1], [], []>} : vector<4x16xf32>, vector<16x128xf32>, vector<4x128xf32> -> vector<4x128xf32>
    %7 = vector.broadcast %2 : vector<4x1xf32> to vector<4x128xf32>
    %8 = arith.addf %6, %7 : vector<4x128xf32>
    %c0_9 = arith.constant 0 : index
    %c0_10 = arith.constant 0 : index
    %c0_11 = arith.constant 0 : index
    %9 = vector.load %arg5[%c0_9, %c0_10, %c0_11] : memref<2x4x128xf32, #tpu.memory_space<vmem>>, vector<1x4x128xf32>
    %10 = vector.shape_cast %9 : vector<1x4x128xf32> to vector<4x128xf32>
    %11 = vector.shape_cast %8 : vector<4x128xf32> to vector<1x4x128xf32>
    tpu.vector_store %arg5[%c0_9, %c0_10, %c0_11], %11 {strides = array<i32>} : memref<2x4x128xf32, #tpu.memory_space<vmem>>, vector<1x4x128xf32>,
    %c1 = arith.constant 1 : index
    %c0_12 = arith.constant 0 : index
    %c0_13 = arith.constant 0 : index
    %12 = vector.load %arg1[%c1, %c0_12, %c0_13] : memref<2x4x16xf32, #tpu.memory_space<vmem>>, vector<1x4x16xf32>
    %13 = vector.shape_cast %12 : vector<1x4x16xf32> to vector<4x16xf32>
    %cst_14 = arith.constant dense<0.000000e+00> : vector<4x16xf32>
    %14 = tpu.matmul %1, %13, %cst_14 {dimension_numbers = #tpu.dot_dimension_numbers<[1], [0], [0], [1], [0, 0, 1, 1], [], []>} : vector<4x4xf32>, vector<4x16xf32>, vector<4x16xf32> -> vector<4x16xf32>
    %cst_15 = arith.constant dense<0.000000e+00> : vector<4x128xf32>
    %15 = tpu.matmul %14, %0, %cst_15 {dimension_numbers = #tpu.dot_dimension_numbers<[1], [0], [0], [1], [0, 0, 1, 1], [], []>} : vector<4x16xf32>, vector<16x128xf32>, vector<4x128xf32> -> vector<4x128xf32>
    %16 = vector.broadcast %2 : vector<4x1xf32> to vector<4x128xf32>
    %17 = arith.addf %15, %16 : vector<4x128xf32>
    %c1_16 = arith.constant 1 : index
    %c0_17 = arith.constant 0 : index
    %c0_18 = arith.constant 0 : index
    %18 = vector.load %arg5[%c1_16, %c0_17, %c0_18] : memref<2x4x128xf32, #tpu.memory_space<vmem>>, vector<1x4x128xf32>
    %19 = vector.shape_cast %18 : vector<1x4x128xf32> to vector<4x128xf32>
    %20 = vector.shape_cast %17 : vector<4x128xf32> to vector<1x4x128xf32>
    tpu.vector_store %arg5[%c1_16, %c0_17, %c0_18], %20 {strides = array<i32>} : memref<2x4x128xf32, #tpu.memory_space<vmem>>, vector<1x4x128xf32>,
    return
  }
  func.func @transform_0(%arg0: i32) -> (i32, i32, i32) {
    %c0_i32 = arith.constant 0 : i32
    %c0_i32_0 = arith.constant 0 : i32
    %c0_i32_1 = arith.constant 0 : i32
    return %arg0, %c0_i32, %c0_i32_0 : i32, i32, i32
  }
  func.func @transform_1(%arg0: i32) -> (i32, i32) {
    %c0_i32 = arith.constant 0 : i32
    %c0_i32_0 = arith.constant 0 : i32
    %c0_i32_1 = arith.constant 0 : i32
    return %c0_i32, %c0_i32_0 : i32, i32
  }
  func.func @transform_2(%arg0: i32) -> (i32, i32) {
    %c0_i32 = arith.constant 0 : i32
    %c0_i32_0 = arith.constant 0 : i32
    %c0_i32_1 = arith.constant 0 : i32
    return %c0_i32, %c0_i32_0 : i32, i32
  }
  func.func @transform_3(%arg0: i32) -> (i32, i32) {
    %c0_i32 = arith.constant 0 : i32
    %c0_i32_0 = arith.constant 0 : i32
    %c0_i32_1 = arith.constant 0 : i32
    return %c0_i32, %c0_i32_0 : i32, i32
  }
  func.func @transform_4(%arg0: i32) -> (i32, i32, i32) {
    %c0_i32 = arith.constant 0 : i32
    %c0_i32_0 = arith.constant 0 : i32
    %c0_i32_1 = arith.constant 0 : i32
    return %arg0, %c0_i32, %c0_i32_0 : i32, i32, i32
  }
}

</mosaic_0001>

<llo_original>
// kernel: tpu_custom_call.1
$region0: #{tpu_custom_call.1}
  #allocation0 [shape = 'u32[]', space=smem, size = 0x4, offset = 0x4, fixed_abs, tag = 'smem constant byte address 0x4 - core index']
  #allocation1 [shape = 'u32[144,128]{1,0:T(1,128)}', space=vmem, size = 0x12000, scoped, tag = 'internal scratch']
  %s0 = inlined_call_operand.hbm [shape: f32[2,4,16], index: 0, kind: input, shape index: {}]
  %s1 = inlined_call_operand.hbm [shape: f32[16,128], index: 1, kind: input, shape index: {}]
  %s2 = inlined_call_operand.vmem [shape: f32[4,4], index: 2, kind: input, shape index: {}]
  %s3 = inlined_call_operand.vmem [shape: f32[4,1], index: 3, kind: input, shape index: {}]
  %s4 = inlined_call_operand.hbm [shape: f32[2,4,128], index: 4, kind: output, shape index: {}]
  %s5 = sld [smem:[#allocation0]]
  $region34: #{tpu_custom_call.1} parent=0
    _
  %s7 = ssub.s32 1, %s5
  %s8 = scalar_select 0, %s7, %s5
  $region1: #{tpu_custom_call.1} parent=0
    #allocation2 [shape = 'u8[4096]{0}', space=vmem, size = 0x1000, scoped, tag = 'input window, operand 0, single buffered']
    #allocation3 [shape = 's32[1]{0}', space=sflag, size = 0x4, scoped, tag = 'scoped memory for tpu_custom_call.1']
    #allocation4 [shape = 's32[1]{0}', space=sflag, size = 0x4, scoped, tag = 'scoped memory for tpu_custom_call.1']
    #allocation5 [shape = 'u8[8192]{0}', space=vmem, size = 0x2000, scoped, tag = 'input window, operand 1, single buffered']
    #allocation6 [shape = 's32[1]{0}', space=sflag, size = 0x4, scoped, tag = 'scoped memory for tpu_custom_call.1']
    #allocation7 [shape = 'u8[4096]{0}', space=vmem, size = 0x1000, scoped, tag = 'output window, operand 0, single buffered']
    %9 = vsyncpa [#allocation3], 0
    %10 = vsyncpa [#allocation6], 0
    %11 = vsyncpa [#allocation4], 0
    // Predicated region
    $region2: #{tpu_custom_call.1} parent=1 // pred_check
      _
    $region3: #{tpu_custom_call.1} parent=1 // pred_check_branch
      %13 = sbr.rel (0) target = $region5
    $region4: #{tpu_custom_call.1} parent=1 // pred_region
      %s15 = ssub.s32 128, 128
      %16 = vsyncadd [#allocation3], %s15
      %s17 = sshll.u32 [#allocation2], 4
      %s18 = int_to_ptr.vmem [resolvable:$true] %s17
      %23 = dma.hbm_to_vmem [thread:$0]  %s0, 128, %s18, [#allocation3], 64, 64, 4
    $region5: #{tpu_custom_call.1} parent=1 // pred_fallthru
      _
    // Predicated region
    $region6: #{tpu_custom_call.1} parent=1 // pred_check
      _
    $region7: #{tpu_custom_call.1} parent=1 // pred_check_branch
      %25 = sbr.rel (0) target = $region9
    $region8: #{tpu_custom_call.1} parent=1 // pred_region
      %s27 = ssub.s32 256, 256
      %28 = vsyncadd [#allocation6], %s27
      %s29 = sshll.u32 [#allocation5], 4
      %s30 = int_to_ptr.vmem [resolvable:$true] %s29
      %35 = dma.hbm_to_vmem [thread:$0]  %s1, 256, %s30, [#allocation6], 128, 128, 8
    $region9: #{tpu_custom_call.1} parent=1 // pred_fallthru
      _
    // Predicated region
    $region10: #{tpu_custom_call.1} parent=1 // pred_check
      _
    $region11: #{tpu_custom_call.1} parent=1 // pred_check_branch
      %37 = sbr.rel (0) target = $region13
    $region12: #{tpu_custom_call.1} parent=1 // pred_region
      _
    $region13: #{tpu_custom_call.1} parent=1 // pred_fallthru
      _
    // Predicated region
    $region14: #{tpu_custom_call.1} parent=1 // pred_check
      _
    $region15: #{tpu_custom_call.1} parent=1 // pred_check_branch
      %39 = sbr.rel (0) target = $region17
    $region16: #{tpu_custom_call.1} parent=1 // pred_region
      _
    $region17: #{tpu_custom_call.1} parent=1 // pred_fallthru
      _
    // Predicated region
    $region18: #{tpu_custom_call.1} parent=1 // pred_check
      _
    $region19: #{tpu_custom_call.1} parent=1 // pred_check_branch
      %41 = sbr.rel (0) target = $region21
    $region20: #{tpu_custom_call.1} parent=1 // pred_region
      %42 = dma.done [#allocation3], 128
    $region21: #{tpu_custom_call.1} parent=1 // pred_fallthru
      _
    // Predicated region
    $region22: #{tpu_custom_call.1} parent=1 // pred_check
      _
    $region23: #{tpu_custom_call.1} parent=1 // pred_check_branch
      %44 = sbr.rel (0) target = $region25
    $region24: #{tpu_custom_call.1} parent=1 // pred_region
      %45 = dma.done [#allocation6], 256
    $region25: #{tpu_custom_call.1} parent=1 // pred_fallthru
      _
    %v46 = vld [vmem:[#allocation5] sm:$0xff]
    %v47 = vld [vmem:[#allocation5 + $0x8] sm:$0xff]
    %v48 = vld [vmem:[%s2] sm:$0xf]
    %v49 = vld [vmem:[%s3] sm:$0xf]
    %v50 = vld [vmem:[#allocation2] sm:$0xf]
    %vm51 = vcmask 31744
    %v53 = vsel %vm51, %v48, 0
    %vm55 = vcmask 1043456
    %v57 = vsel %vm55, %v50, 0
    %59 = vmatprep.subr.mxu0 0.0
    %60 = vmatpush1.msra.mxu0 %v57
    %61 = vmatprep.subr.mxu0 0.0
    %62 = vmatpush1.msra.mxu0 0.0
    %63 = vmatprep.subr.mxu0 0.0
    %64 = vmatpush1.msra.mxu0 0.0
    %65 = vmatprep.subr.mxu0 0.0
    %66 = vmatpush1.msra.mxu0 0.0
    %67 = vmatprep.subr.mxu0 0.0
    %68 = vmatpush1.msra.mxu0 0.0
    %69 = vmatprep.subr.mxu0 0.0
    %70 = vmatpush1.msra.mxu0 0.0
    %71 = vmatprep.subr.mxu0 0.0
    %72 = vmatpush1.msra.mxu0 0.0
    %73 = vmatprep.subr.mxu0 0.0
    %74 = vmatpush1.msra.mxu0 0.0
    %75 = vmatprep.subr.mxu0 0.0
    %76 = vmatpush1.msra.mxu0 0.0
    %77 = vmatprep.subr.mxu0 0.0
    %78 = vmatpush1.msra.mxu0 0.0
    %79 = vmatprep.subr.mxu0 0.0
    %80 = vmatpush1.msra.mxu0 0.0
    %81 = vmatprep.subr.mxu0 0.0
    %82 = vmatpush1.msra.mxu0 0.0
    %83 = vmatprep.subr.mxu0 0.0
    %84 = vmatpush1.msra.mxu0 0.0
    %85 = vmatprep.subr.mxu0 0.0
    %86 = vmatpush1.msra.mxu0 0.0
    %87 = vmatprep.subr.mxu0 0.0
    %88 = vmatpush1.msra.mxu0 0.0
    %89 = vmatprep.subr.mxu0 0.0
    %90 = vmatpush1.msra.mxu0 0.0
    %91 = vmatprep.subr.mxu0 0.0
    %92 = vmatpush1.msra.mxu0 0.0
    %93 = vmatprep.subr.mxu0 0.0
    %94 = vmatpush1.msra.mxu0 0.0
    %95 = vmatprep.subr.mxu0 0.0
    %96 = vmatpush1.msra.mxu0 0.0
    %97 = vmatprep.subr.mxu0 0.0
    %98 = vmatpush1.msra.mxu0 0.0
    %99 = vmatprep.subr.mxu0 0.0
    %100 = vmatpush1.msra.mxu0 0.0
    %101 = vmatprep.subr.mxu0 0.0
    %102 = vmatpush1.msra.mxu0 0.0
    %103 = vmatprep.subr.mxu0 0.0
    %104 = vmatpush1.msra.mxu0 0.0
    %105 = vmatprep.subr.mxu0 0.0
    %106 = vmatpush1.msra.mxu0 0.0
    %107 = vmatprep.subr.mxu0 0.0
    %108 = vmatpush1.msra.mxu0 0.0
    %109 = vmatprep.subr.mxu0 0.0
    %110 = vmatpush1.msra.mxu0 0.0
    %111 = vmatprep.subr.mxu0 0.0
    %112 = vmatpush1.msra.mxu0 0.0
    %113 = vmatprep.subr.mxu0 0.0
    %114 = vmatpush1.msra.mxu0 0.0
    %115 = vmatprep.subr.mxu0 0.0
    %116 = vmatpush1.msra.mxu0 0.0
    %117 = vmatprep.subr.mxu0 0.0
    %118 = vmatpush1.msra.mxu0 0.0
    %119 = vmatprep.subr.mxu0 0.0
    %120 = vmatpush1.msra.mxu0 0.0
    %121 = vmatprep.subr.mxu0 0.0
    %122 = vmatpush1.msra.mxu0 0.0
    %123 = vmatprep.mubr.f32.mxu0 0.0
    %124 = vmatmul.mubr.f32.gmra.mrb[0].mxu0 %v53
    %v125 = vpop.f32.mrb[0].mxu0
    %v126 = vadd.f32 0.0, %v125
    %v127 = vpop.f32.mrb[0].mxu0
    %128 = vdwg.mxu0
    %130 = vset.pattern.permute.xlu0 0
    %131 = vperm.xlu0 %130, %v49
    %v132 = vpop.permute.xlu0 %131
    %vm134 = vcmask 130048
    %v136 = vsel %vm134, %v126, 0
    %138 = vmatprep.subr.mxu0 0.0
    %139 = vmatpush1.msra.mxu0 %v46
    %140 = vmatprep.subr.mxu0 0.0
    %141 = vmatpush1.msra.mxu0 %v47
    %142 = vmatprep.subr.mxu0 0.0
    %143 = vmatpush1.msra.mxu0 0.0
    %144 = vmatprep.subr.mxu0 0.0
    %145 = vmatpush1.msra.mxu0 0.0
    %146 = vmatprep.subr.mxu0 0.0
    %147 = vmatpush1.msra.mxu0 0.0
    %148 = vmatprep.subr.mxu0 0.0
    %149 = vmatpush1.msra.mxu0 0.0
    %150 = vmatprep.subr.mxu0 0.0
    %151 = vmatpush1.msra.mxu0 0.0
    %152 = vmatprep.subr.mxu0 0.0
    %153 = vmatpush1.msra.mxu0 0.0
    %154 = vmatprep.subr.mxu0 0.0
    %155 = vmatpush1.msra.mxu0 0.0
    %156 = vmatprep.subr.mxu0 0.0
    %157 = vmatpush1.msra.mxu0 0.0
    %158 = vmatprep.subr.mxu0 0.0
    %159 = vmatpush1.msra.mxu0 0.0
    %160 = vmatprep.subr.mxu0 0.0
    %161 = vmatpush1.msra.mxu0 0.0
    %162 = vmatprep.subr.mxu0 0.0
    %163 = vmatpush1.msra.mxu0 0.0
    %164 = vmatprep.subr.mxu0 0.0
    %165 = vmatpush1.msra.mxu0 0.0
    %166 = vmatprep.subr.mxu0 0.0
    %167 = vmatpush1.msra.mxu0 0.0
    %168 = vmatprep.subr.mxu0 0.0
    %169 = vmatpush1.msra.mxu0 0.0
    %170 = vmatprep.subr.mxu0 0.0
    %171 = vmatpush1.msra.mxu0 0.0
    %172 = vmatprep.subr.mxu0 0.0
    %173 = vmatpush1.msra.mxu0 0.0
    %174 = vmatprep.subr.mxu0 0.0
    %175 = vmatpush1.msra.mxu0 0.0
    %176 = vmatprep.subr.mxu0 0.0
    %177 = vmatpush1.msra.mxu0 0.0
    %178 = vmatprep.subr.mxu0 0.0
    %179 = vmatpush1.msra.mxu0 0.0
    %180 = vmatprep.subr.mxu0 0.0
    %181 = vmatpush1.msra.mxu0 0.0
    %182 = vmatprep.subr.mxu0 0.0
    %183 = vmatpush1.msra.mxu0 0.0
    %184 = vmatprep.subr.mxu0 0.0
    %185 = vmatpush1.msra.mxu0 0.0
    %186 = vmatprep.subr.mxu0 0.0
    %187 = vmatpush1.msra.mxu0 0.0
    %188 = vmatprep.subr.mxu0 0.0
    %189 = vmatpush1.msra.mxu0 0.0
    %190 = vmatprep.subr.mxu0 0.0
    %191 = vmatpush1.msra.mxu0 0.0
    %192 = vmatprep.subr.mxu0 0.0
    %193 = vmatpush1.msra.mxu0 0.0
    %194 = vmatprep.subr.mxu0 0.0
    %195 = vmatpush1.msra.mxu0 0.0
    %196 = vmatprep.subr.mxu0 0.0
    %197 = vmatpush1.msra.mxu0 0.0
    %198 = vmatprep.subr.mxu0 0.0
    %199 = vmatpush1.msra.mxu0 0.0
    %200 = vmatprep.subr.mxu0 0.0
    %201 = vmatpush1.msra.mxu0 0.0
    %202 = vmatprep.mubr.f32.mxu0 0.0
    %203 = vmatmul.mubr.f32.gmra.mrb[0].mxu0 %v136
    %v204 = vpop.f32.mrb[0].mxu0
    %v205 = vadd.f32 %v132, %v204
    %v206 = vpop.f32.mrb[0].mxu0
    %207 = vdwg.mxu0
    %208 = vst [vmem:[#allocation7] sm:$0xf] %v205
    %s209 = scalar_lea.vmem [#allocation2], 4
    %v210 = vld [vmem:[%s209] sm:$0xf]
    %v212 = vsel %vm55, %v210, 0
    %214 = vmatprep.subr.mxu0 0.0
    %215 = vmatpush1.msra.mxu0 %v212
    %216 = vmatprep.subr.mxu0 0.0
    %217 = vmatpush1.msra.mxu0 0.0
    %218 = vmatprep.subr.mxu0 0.0
    %219 = vmatpush1.msra.mxu0 0.0
    %220 = vmatprep.subr.mxu0 0.0
    %221 = vmatpush1.msra.mxu0 0.0
    %222 = vmatprep.subr.mxu0 0.0
    %223 = vmatpush1.msra.mxu0 0.0
    %224 = vmatprep.subr.mxu0 0.0
    %225 = vmatpush1.msra.mxu0 0.0
    %226 = vmatprep.subr.mxu0 0.0
    %227 = vmatpush1.msra.mxu0 0.0
    %228 = vmatprep.subr.mxu0 0.0
    %229 = vmatpush1.msra.mxu0 0.0
    %230 = vmatprep.subr.mxu0 0.0
    %231 = vmatpush1.msra.mxu0 0.0
    %232 = vmatprep.subr.mxu0 0.0
    %233 = vmatpush1.msra.mxu0 0.0
    %234 = vmatprep.subr.mxu0 0.0
    %235 = vmatpush1.msra.mxu0 0.0
    %236 = vmatprep.subr.mxu0 0.0
    %237 = vmatpush1.msra.mxu0 0.0
    %238 = vmatprep.subr.mxu0 0.0
    %239 = vmatpush1.msra.mxu0 0.0
    %240 = vmatprep.subr.mxu0 0.0
    %241 = vmatpush1.msra.mxu0 0.0
    %242 = vmatprep.subr.mxu0 0.0
    %243 = vmatpush1.msra.mxu0 0.0
    %244 = vmatprep.subr.mxu0 0.0
    %245 = vmatpush1.msra.mxu0 0.0
    %246 = vmatprep.subr.mxu0 0.0
    %247 = vmatpush1.msra.mxu0 0.0
    %248 = vmatprep.subr.mxu0 0.0
    %249 = vmatpush1.msra.mxu0 0.0
    %250 = vmatprep.subr.mxu0 0.0
    %251 = vmatpush1.msra.mxu0 0.0
    %252 = vmatprep.subr.mxu0 0.0
    %253 = vmatpush1.msra.mxu0 0.0
    %254 = vmatprep.subr.mxu0 0.0
    %255 = vmatpush1.msra.mxu0 0.0
    %256 = vmatprep.subr.mxu0 0.0
    %257 = vmatpush1.msra.mxu0 0.0
    %258 = vmatprep.subr.mxu0 0.0
    %259 = vmatpush1.msra.mxu0 0.0
    %260 = vmatprep.subr.mxu0 0.0
    %261 = vmatpush1.msra.mxu0 0.0
    %262 = vmatprep.subr.mxu0 0.0
    %263 = vmatpush1.msra.mxu0 0.0
    %264 = vmatprep.subr.mxu0 0.0
    %265 = vmatpush1.msra.mxu0 0.0
    %266 = vmatprep.subr.mxu0 0.0
    %267 = vmatpush1.msra.mxu0 0.0
    %268 = vmatprep.subr.mxu0 0.0
    %269 = vmatpush1.msra.mxu0 0.0
    %270 = vmatprep.subr.mxu0 0.0
    %271 = vmatpush1.msra.mxu0 0.0
    %272 = vmatprep.subr.mxu0 0.0
    %273 = vmatpush1.msra.mxu0 0.0
    %274 = vmatprep.subr.mxu0 0.0
    %275 = vmatpush1.msra.mxu0 0.0
    %276 = vmatprep.subr.mxu0 0.0
    %277 = vmatpush1.msra.mxu0 0.0
    %278 = vmatprep.mubr.f32.mxu0 0.0
    %279 = vmatmul.mubr.f32.gmra.mrb[0].mxu0 %v53
    %v280 = vpop.f32.mrb[0].mxu0
    %v281 = vadd.f32 0.0, %v280
    %v282 = vpop.f32.mrb[0].mxu0
    %283 = vdwg.mxu0
    %v285 = vsel %vm134, %v281, 0
    %287 = vmatprep.subr.mxu0 0.0
    %288 = vmatpush1.msra.mxu0 %v46
    %289 = vmatprep.subr.mxu0 0.0
    %290 = vmatpush1.msra.mxu0 %v47
    %291 = vmatprep.subr.mxu0 0.0
    %292 = vmatpush1.msra.mxu0 0.0
    %293 = vmatprep.subr.mxu0 0.0
    %294 = vmatpush1.msra.mxu0 0.0
    %295 = vmatprep.subr.mxu0 0.0
    %296 = vmatpush1.msra.mxu0 0.0
    %297 = vmatprep.subr.mxu0 0.0
    %298 = vmatpush1.msra.mxu0 0.0
    %299 = vmatprep.subr.mxu0 0.0
    %300 = vmatpush1.msra.mxu0 0.0
    %301 = vmatprep.subr.mxu0 0.0
    %302 = vmatpush1.msra.mxu0 0.0
    %303 = vmatprep.subr.mxu0 0.0
    %304 = vmatpush1.msra.mxu0 0.0
    %305 = vmatprep.subr.mxu0 0.0
    %306 = vmatpush1.msra.mxu0 0.0
    %307 = vmatprep.subr.mxu0 0.0
    %308 = vmatpush1.msra.mxu0 0.0
    %309 = vmatprep.subr.mxu0 0.0
    %310 = vmatpush1.msra.mxu0 0.0
    %311 = vmatprep.subr.mxu0 0.0
    %312 = vmatpush1.msra.mxu0 0.0
    %313 = vmatprep.subr.mxu0 0.0
    %314 = vmatpush1.msra.mxu0 0.0
    %315 = vmatprep.subr.mxu0 0.0
    %316 = vmatpush1.msra.mxu0 0.0
    %317 = vmatprep.subr.mxu0 0.0
    %318 = vmatpush1.msra.mxu0 0.0
    %319 = vmatprep.subr.mxu0 0.0
    %320 = vmatpush1.msra.mxu0 0.0
    %321 = vmatprep.subr.mxu0 0.0
    %322 = vmatpush1.msra.mxu0 0.0
    %323 = vmatprep.subr.mxu0 0.0
    %324 = vmatpush1.msra.mxu0 0.0
    %325 = vmatprep.subr.mxu0 0.0
    %326 = vmatpush1.msra.mxu0 0.0
    %327 = vmatprep.subr.mxu0 0.0
    %328 = vmatpush1.msra.mxu0 0.0
    %329 = vmatprep.subr.mxu0 0.0
    %330 = vmatpush1.msra.mxu0 0.0
    %331 = vmatprep.subr.mxu0 0.0
    %332 = vmatpush1.msra.mxu0 0.0
    %333 = vmatprep.subr.mxu0 0.0
    %334 = vmatpush1.msra.mxu0 0.0
    %335 = vmatprep.subr.mxu0 0.0
    %336 = vmatpush1.msra.mxu0 0.0
    %337 = vmatprep.subr.mxu0 0.0
    %338 = vmatpush1.msra.mxu0 0.0
    %339 = vmatprep.subr.mxu0 0.0
    %340 = vmatpush1.msra.mxu0 0.0
    %341 = vmatprep.subr.mxu0 0.0
    %342 = vmatpush1.msra.mxu0 0.0
    %343 = vmatprep.subr.mxu0 0.0
    %344 = vmatpush1.msra.mxu0 0.0
    %345 = vmatprep.subr.mxu0 0.0
    %346 = vmatpush1.msra.mxu0 0.0
    %347 = vmatprep.subr.mxu0 0.0
    %348 = vmatpush1.msra.mxu0 0.0
    %349 = vmatprep.subr.mxu0 0.0
    %350 = vmatpush1.msra.mxu0 0.0
    %351 = vmatprep.mubr.f32.mxu0 0.0
    %352 = vmatmul.mubr.f32.gmra.mrb[0].mxu0 %v285
    %v353 = vpop.f32.mrb[0].mxu0
    %v354 = vadd.f32 %v132, %v353
    %v355 = vpop.f32.mrb[0].mxu0
    %356 = vdwg.mxu0
    %s357 = scalar_lea.vmem [#allocation7], 4
    %358 = vst [vmem:[%s357] sm:$0xf] %v354
    // Predicated region
    $region26: #{tpu_custom_call.1} parent=1 // pred_check
      _
    $region27: #{tpu_custom_call.1} parent=1 // pred_check_branch
      %360 = sbr.rel (0) target = $region29
    $region28: #{tpu_custom_call.1} parent=1 // pred_region
      %s362 = ssub.s32 128, 128
      %363 = vsyncadd [#allocation4], %s362
      %s364 = sshll.u32 [#allocation7], 4
      %s365 = int_to_ptr.vmem [resolvable:$true] %s364
      %370 = dma.vmem_to_hbm [thread:$0]  %s365, 128, %s4, [#allocation4], 64, 64, 4
    $region29: #{tpu_custom_call.1} parent=1 // pred_fallthru
      _
    // Predicated region
    $region30: #{tpu_custom_call.1} parent=1 // pred_check
      _
    $region31: #{tpu_custom_call.1} parent=1 // pred_check_branch
      %372 = sbr.rel (0) target = $region33
    $region32: #{tpu_custom_call.1} parent=1 // pred_region
      %373 = dma.done [#allocation4], 128
    $region33: #{tpu_custom_call.1} parent=1 // pred_fallthru
      _
    %374 = vsyncpa [#allocation3], 1
    %375 = vsyncpa [#allocation6], 1
    %376 = vsyncpa [#allocation4], 1

</llo_original>
